<compile_context>
chip_gen: v6e
topology: v6e:2x2x1
jax: 0.10.0
libtpu: 0.0.40
codegen_flags: <defaults>
</compile_context>

<pallas_src>
import functools

import jax
import jax.numpy as jnp
from jax.experimental import pallas as pl
from jax.experimental.pallas import tpu as pltpu

_MIB = 1024 * 1024


def _simclr_step_kernel(x_ref, w1_ref, b1_ref, w2_ref, b2_ref, loss_ref,
                        acc_ref, *, batch_size: int, temperature: float):
    """Grid axis 0 streams the encoder contraction (in_dim / K) axis.

    x_ref : (2B, tk)       bf16  — K-slice of the flattened two-view batch
    w1_ref: (tk, hidden)   bf16  — K-slice of the encoder weight (streamed)
    b1_ref: (1, hidden)    f32   — resident
    w2_ref: (hidden, proj) bf16  — resident
    b2_ref: (1, proj)      f32   — resident
    loss_ref: (1, 1)       f32   — written on the last K step only
    acc_ref : (2B, hidden) f32 VMEM scratch — encoder accumulator
    """
    k = pl.program_id(0)

    # --- init accumulator on the first K step ---
    @pl.when(k == 0)
    def _():
        acc_ref[...] = jnp.zeros_like(acc_ref)

    # --- encoder matmul: bf16 operands, f32 accumulation on the MXU ---
    acc_ref[...] += jnp.dot(x_ref[...], w1_ref[...],
                            preferred_element_type=jnp.float32)

    # --- finalize: bias + ReLU, projection head, NT-Xent loss ---
    @pl.when(k == pl.num_programs(0) - 1)
    def _():
        n = 2 * batch_size
        inv_t = jnp.float32(1.0 / temperature)

        h = jnp.maximum(acc_ref[...] + b1_ref[...], 0.0)             # f32
        z = jnp.dot(h.astype(jnp.bfloat16), w2_ref[...],
                    preferred_element_type=jnp.float32) + b2_ref[...]

        # L2 normalization via rsqrt (EUP), eps^2 guard inside the sum.
        inv_norm = jax.lax.rsqrt(
            jnp.sum(z * z, axis=-1, keepdims=True) + jnp.float32(1e-16))
        zn = z * inv_norm                                             # (N, proj) f32

        # Cosine-similarity matrix (N, N): bf16 operands (MXU fast path),
        # f32 accumulate; 1/T folded into the LHS (O(N*proj) muls).
        sim = jax.lax.dot_general(
            (zn * inv_t).astype(jnp.bfloat16),
            zn.astype(jnp.bfloat16),
            (((1,), (1,)), ((), ())),
            preferred_element_type=jnp.float32)                       # (N, N) f32

        # Positive pairs: row i pairs with row (i + B) mod N. Elementwise
        # O(N*proj) form: sum_i sim(i, pair(i)) == 2 * inv_t * sum(zi * zj),
        # computed on the unscaled f32 embeddings.
        zi = zn[:batch_size]
        zj = zn[batch_size:]
        pos_sum = jnp.sum(zi * zj, axis=(0, 1), keepdims=True)        # (1, 1)

        # CrossEntropy(label=0) over [pos, negatives] == lse_{j != i} - pos_i.
        # Mask / max-subtraction / exp / log all stay in f32.
        row = jax.lax.broadcasted_iota(jnp.int32, (n, n), 0)
        col = jax.lax.broadcasted_iota(jnp.int32, (n, n), 1)
        sim_no_diag = jnp.where(row == col, jnp.float32(-1e30), sim)
        m = jnp.max(sim_no_diag, axis=-1, keepdims=True)
        lse = jnp.log(jnp.sum(jnp.exp(sim_no_diag - m),
                              axis=-1, keepdims=True)) + m            # (N, 1)
        lse_sum = jnp.sum(lse, axis=(0, 1), keepdims=True)            # (1, 1)

        # reduction="sum" then divide by N  ->  mean over the 2B rows.
        loss_ref[...] = (lse_sum - 2.0 * inv_t * pos_sum) * jnp.float32(1.0 / n)


def _vmem_limit_bytes():
    """Per-generation scoped-VMEM limit.

    The 16 MiB (v5e) / 32 MiB (v6e, v7x) scoped defaults artificially cap the
    K tile; raise the limit explicitly but stay below v7x's 64 MiB physical
    VMEM with headroom for compiler internal scratch.
    """
    try:
        cap = int(pltpu.get_tpu_info().vmem_capacity_bytes)
    except Exception:  # not queryable: assume the smallest generation (v7x)
        cap = 64 * _MIB
    return int(min(48 * _MIB, (cap * 3) // 4))


def _pick_k_tile(n_rows, in_dim, hidden, proj, vmem_limit):
    """Largest K tile whose double-buffered bf16 x/w1 slabs fit the budget.

    Bigger blocks amortize the ~0.35 us per-grid-step overhead; for small
    in_dim this returns in_dim, i.e. a single grid step (grid=(1,)).
    """
    resident = 2 * (hidden * 4 + hidden * proj * 2 + proj * 4)   # b1/w2/b2, 2 bufs
    acc = n_rows * hidden * 4                                    # f32 accumulator
    epilogue = 3 * n_rows * n_rows * 4 + 4 * n_rows * proj * 4   # sim + f32 temps (rough)
    headroom = 4 * _MIB
    stream_budget = max(vmem_limit - resident - acc - epilogue - headroom, 2 * _MIB)
    bytes_per_k = 2 * 2 * (n_rows + hidden)      # 2 buffers * bf16 * (x col + w1 row)
    tk_cap = max(128, stream_budget // bytes_per_k)

    if in_dim <= tk_cap:
        return in_dim                            # single K step, no grid overhead
    assert in_dim % 128 == 0, "streamed in_dim must be a multiple of 128"
    tk = (tk_cap // 128) * 128
    while tk > 128 and in_dim % tk != 0:
        tk -= 128
    assert in_dim % tk == 0
    return tk


def simclr_forward_step(images, params, *, temperature=0.5):
    """One SimCLRTrainer inner-loop forward: two views -> net -> NT_Xent loss."""
    b, c, h, w = images.shape
    n_rows = 2 * b

    # images = torch.cat([images, torch.flip(images, dims=[-1])], dim=0)
    # Keep the concatenated two-view copy in bf16 (MXU operand dtype) to halve
    # its HBM traffic.
    imgs = images.astype(jnp.bfloat16)
    two_view = jnp.concatenate([imgs, jnp.flip(imgs, axis=-1)], axis=0)
    x = two_view.reshape(n_rows, c * h * w)

    w1, b1, w2, b2 = params
    in_dim, hidden = w1.shape
    proj = w2.shape[1]

    vmem_limit = _vmem_limit_bytes()
    tk = _pick_k_tile(n_rows, in_dim, hidden, proj, vmem_limit)
    nk = in_dim // tk

    kernel = functools.partial(_simclr_step_kernel,
                               batch_size=b, temperature=temperature)

    grid_spec = pltpu.PrefetchScalarGridSpec(
        num_scalar_prefetch=0,
        grid=(nk,),
        in_specs=[
            # x and w1 stream their K slices (pipelined by Pallas).
            pl.BlockSpec((n_rows, tk), lambda k: (0, k)),
            pl.BlockSpec((tk, hidden), lambda k: (k, 0)),
            # b1 / w2 / b2: same block every step -> stay resident in VMEM.
            # TODO(synk): pipeline_mode=pl.Buffered(1) would halve their VMEM
            # footprint; kept default-buffered for compile portability.
            pl.BlockSpec((1, hidden), lambda k: (0, 0)),
            pl.BlockSpec((hidden, proj), lambda k: (0, 0)),
            pl.BlockSpec((1, proj), lambda k: (0, 0)),
        ],
        out_specs=pl.BlockSpec((1, 1), lambda k: (0, 0)),
        scratch_shapes=[pltpu.VMEM((n_rows, hidden), jnp.float32)],
    )

    loss = pl.pallas_call(
        kernel,
        out_shape=jax.ShapeDtypeStruct((1, 1), jnp.float32),
        grid_spec=grid_spec,
        # K is a reduction axis (accumulator carried across steps).
        compiler_params=pltpu.CompilerParams(
            dimension_semantics=("arbitrary",),
            vmem_limit_bytes=vmem_limit),
    )(x, w1, b1, w2, b2)
    return loss[0, 0]


def init_params(key, in_dim, hidden_dim, proj_dim):
    k1, k2 = jax.random.split(key)
    # Weights stored in bf16 (MXU operands); biases stay f32.
    w1 = (jax.random.normal(k1, (in_dim, hidden_dim), jnp.float32)
          * 0.02).astype(jnp.bfloat16)
    b1 = jnp.zeros((1, hidden_dim), jnp.float32)
    w2 = (jax.random.normal(k2, (hidden_dim, proj_dim), jnp.float32)
          * 0.02).astype(jnp.bfloat16)
    b2 = jnp.zeros((1, proj_dim), jnp.float32)
    return w1, b1, w2, b2


if __name__ == "__main__":
    # Small SimCLR-style batch (NCHW) with lane/sublane-aligned dims:
    # 2B = 16 rows, in_dim = 4*16*16 = 1024, hidden = 256, proj = 128.
    # At these sizes the K-tile picker collapses the grid to a single step.
    B, C, H, W = 8, 4, 16, 16
    HIDDEN, PROJ = 256, 128
    TEMPERATURE = 0.5

    key = jax.random.PRNGKey(0)
    k_img, k_par = jax.random.split(key)
    images = jax.random.normal(k_img, (B, C, H, W), jnp.float32)
    params = init_params(k_par, C * H * W, HIDDEN, PROJ)

    loss = simclr_forward_step(images, params, temperature=TEMPERATURE)
    loss = jax.block_until_ready(loss)
    print("KERNEL_OK")
</pallas_src>

<mosaic_0001>
module attributes {stable_mosaic.version = 11 : i64} {
  func.func @_simclr_step_kernel(%arg0: i32, %arg1: memref<16x1024xbf16, #tpu.memory_space<vmem>>, %arg2: memref<1024x256xbf16, #tpu.memory_space<vmem>>, %arg3: memref<1x256xf32, #tpu.memory_space<vmem>>, %arg4: memref<256x128xbf16, #tpu.memory_space<vmem>>, %arg5: memref<1x128xf32, #tpu.memory_space<vmem>>, %arg6: memref<1x1xf32, #tpu.memory_space<vmem>>, %arg7: memref<16x256xf32, #tpu.memory_space<vmem>>) attributes {dimension_semantics = [#tpu.dimension_semantics<arbitrary>], iteration_bounds = array<i64: 1>, scalar_prefetch = 0 : i64, scratch_operands = 1 : i64, tpu.core_type = #tpu.core_type<tc>, window_params = [{transform_indices = @transform_0, window_bounds = array<i64: 16, 1024>}, {transform_indices = @transform_1, window_bounds = array<i64: 1024, 256>}, {pipeline_mode = #tpu.pipeline_mode<synchronous>, transform_indices = @transform_2, window_bounds = array<i64: 1, 256>}, {pipeline_mode = #tpu.pipeline_mode<synchronous>, transform_indices = @transform_3, window_bounds = array<i64: 256, 128>}, {pipeline_mode = #tpu.pipeline_mode<synchronous>, transform_indices = @transform_4, window_bounds = array<i64: 1, 128>}, {pipeline_mode = #tpu.pipeline_mode<synchronous>, transform_indices = @transform_5, window_bounds = array<i64: 1, 1>}]} {
    %c0_i32 = arith.constant 0 : i32
    %0 = arith.cmpi eq, %arg0, %c0_i32 : i32
    %1 = arith.extui %0 : i1 to i32
    %c0_i32_0 = arith.constant 0 : i32
    %2 = arith.cmpi ne, %1, %c0_i32_0 : i32
    scf.if %2 {
      %cst_10 = arith.constant 0.000000e+00 : f32
      %12 = vector.broadcast %cst_10 : f32 to vector<16x256xf32>
      %c0_11 = arith.constant 0 : index
      %c0_12 = arith.constant 0 : index
      %13 = vector.load %arg7[%c0_11, %c0_12] : memref<16x256xf32, #tpu.memory_space<vmem>>, vector<16x256xf32>
      tpu.vector_store %arg7[%c0_11, %c0_12], %12 {strides = array<i32>} : memref<16x256xf32, #tpu.memory_space<vmem>>, vector<16x256xf32>,
    } else {
    }
    %c0 = arith.constant 0 : index
    %c0_1 = arith.constant 0 : index
    %3 = vector.load %arg7[%c0, %c0_1] : memref<16x256xf32, #tpu.memory_space<vmem>>, vector<16x256xf32>
    %c0_2 = arith.constant 0 : index
    %c0_3 = arith.constant 0 : index
    %4 = vector.load %arg1[%c0_2, %c0_3] : memref<16x1024xbf16, #tpu.memory_space<vmem>>, vector<16x1024xbf16>
    %c0_4 = arith.constant 0 : index
    %c0_5 = arith.constant 0 : index
    %5 = vector.load %arg2[%c0_4, %c0_5] : memref<1024x256xbf16, #tpu.memory_space<vmem>>, vector<1024x256xbf16>
    %cst = arith.constant dense<0.000000e+00> : vector<16x256xf32>
    %6 = tpu.matmul %4, %5, %cst {dimension_numbers = #tpu.dot_dimension_numbers<[1], [0], [0], [1], [0, 0, 1, 1], [], []>} : vector<16x1024xbf16>, vector<1024x256xbf16>, vector<16x256xf32> -> vector<16x256xf32>
    %7 = arith.addf %3, %6 : vector<16x256xf32>
    %c0_6 = arith.constant 0 : index
    %c0_7 = arith.constant 0 : index
    %8 = vector.load %arg7[%c0_6, %c0_7] : memref<16x256xf32, #tpu.memory_space<vmem>>, vector<16x256xf32>
    tpu.vector_store %arg7[%c0_6, %c0_7], %7 {strides = array<i32>} : memref<16x256xf32, #tpu.memory_space<vmem>>, vector<16x256xf32>,
    %c0_i32_8 = arith.constant 0 : i32
    %9 = arith.cmpi eq, %arg0, %c0_i32_8 : i32
    %10 = arith.extui %9 : i1 to i32
    %c0_i32_9 = arith.constant 0 : i32
    %11 = arith.cmpi ne, %10, %c0_i32_9 : i32
    scf.if %11 {
      %c0_10 = arith.constant 0 : index
      %c0_11 = arith.constant 0 : index
      %12 = vector.load %arg7[%c0_10, %c0_11] : memref<16x256xf32, #tpu.memory_space<vmem>>, vector<16x256xf32>
      %c0_12 = arith.constant 0 : index
      %c0_13 = arith.constant 0 : index
      %13 = vector.load %arg3[%c0_12, %c0_13] : memref<1x256xf32, #tpu.memory_space<vmem>>, vector<1x256xf32>
      %14 = vector.broadcast %13 : vector<1x256xf32> to vector<16x256xf32>
      %15 = arith.addf %12, %14 : vector<16x256xf32>
      %cst_14 = arith.constant 0.000000e+00 : f32
      %16 = vector.broadcast %cst_14 : f32 to vector<16x256xf32>
      %17 = arith.maximumf %15, %16 : vector<16x256xf32>
      %18 = arith.truncf %17 : vector<16x256xf32> to vector<16x256xbf16>
      %c0_15 = arith.constant 0 : index
      %c0_16 = arith.constant 0 : index
      %19 = vector.load %arg4[%c0_15, %c0_16] : memref<256x128xbf16, #tpu.memory_space<vmem>>, vector<256x128xbf16>
      %cst_17 = arith.constant dense<0.000000e+00> : vector<16x128xf32>
      %20 = tpu.matmul %18, %19, %cst_17 {dimension_numbers = #tpu.dot_dimension_numbers<[1], [0], [0], [1], [0, 0, 1, 1], [], []>} : vector<16x256xbf16>, vector<256x128xbf16>, vector<16x128xf32> -> vector<16x128xf32>
      %c0_18 = arith.constant 0 : index
      %c0_19 = arith.constant 0 : index
      %21 = vector.load %arg5[%c0_18, %c0_19] : memref<1x128xf32, #tpu.memory_space<vmem>>, vector<1x128xf32>
      %22 = vector.broadcast %21 : vector<1x128xf32> to vector<16x128xf32>
      %23 = arith.addf %20, %22 : vector<16x128xf32>
      %24 = arith.mulf %23, %23 : vector<16x128xf32>
      %cst_20 = arith.constant dense<0.000000e+00> : vector<16xf32>
      %25 = vector.multi_reduction <add>, %24, %cst_20 [1] : vector<16x128xf32> to vector<16xf32>
      %26 = vector.shape_cast %25 : vector<16xf32> to vector<16x1xf32>
      %cst_21 = arith.constant 1.000000e-16 : f32
      %27 = vector.broadcast %cst_21 : f32 to vector<16x1xf32>
      %28 = arith.addf %26, %27 : vector<16x1xf32>
      %29 = math.rsqrt %28 : vector<16x1xf32>
      %30 = vector.broadcast %29 : vector<16x1xf32> to vector<16x128xf32>
      %31 = arith.mulf %23, %30 : vector<16x128xf32>
      %cst_22 = arith.constant 2.000000e+00 : f32
      %32 = vector.broadcast %cst_22 : f32 to vector<16x128xf32>
      %33 = arith.mulf %31, %32 : vector<16x128xf32>
      %34 = arith.truncf %33 : vector<16x128xf32> to vector<16x128xbf16>
      %35 = arith.truncf %31 : vector<16x128xf32> to vector<16x128xbf16>
      %cst_23 = arith.constant dense<0.000000e+00> : vector<16x16xf32>
      %36 = tpu.matmul %34, %35, %cst_23 {dimension_numbers = #tpu.dot_dimension_numbers<[1], [1], [0], [0], [0, 0, 1, 0], [], []>} : vector<16x128xbf16>, vector<16x128xbf16>, vector<16x16xf32> -> vector<16x16xf32>
      %37 = vector.extract_strided_slice %31 {offsets = [0, 0], sizes = [8, 128], strides = [1, 1]} : vector<16x128xf32> to vector<8x128xf32>
      %38 = vector.extract_strided_slice %31 {offsets = [8, 0], sizes = [8, 128], strides = [1, 1]} : vector<16x128xf32> to vector<8x128xf32>
      %39 = arith.mulf %37, %38 : vector<8x128xf32>
      %40 = vector.shape_cast %39 : vector<8x128xf32> to vector<1x8x128xf32>
      %cst_24 = arith.constant dense<0.000000e+00> : vector<1xf32>
      %41 = vector.multi_reduction <add>, %40, %cst_24 [1, 2] : vector<1x8x128xf32> to vector<1xf32>
      %42 = vector.shape_cast %41 : vector<1xf32> to vector<1x1x1xf32>
      %43 = vector.extract %42[0, 0, 0] : f32 from vector<1x1x1xf32>
      %44 = vector.broadcast %43 : f32 to vector<1x1xf32>
      %45 = tpu.iota {dimensions = array<i32: 0>} : vector<16x16xi32>
      %46 = tpu.iota {dimensions = array<i32: 1>} : vector<16x16xi32>
      %47 = arith.cmpi eq, %45, %46 : vector<16x16xi32>
      %cst_25 = arith.constant -1.000000e+30 : f32
      %48 = vector.broadcast %cst_25 : f32 to vector<16x16xf32>
      %49 = arith.select %47, %48, %36 : vector<16x16xi1>, vector<16x16xf32>
      %cst_26 = arith.constant dense<0xFF800000> : vector<16xf32>
      %50 = vector.multi_reduction <maximumf>, %49, %cst_26 [1] : vector<16x16xf32> to vector<16xf32>
      %51 = vector.shape_cast %50 : vector<16xf32> to vector<16x1xf32>
      %52 = vector.broadcast %51 : vector<16x1xf32> to vector<16x16xf32>
      %53 = arith.subf %49, %52 : vector<16x16xf32>
      %54 = math.exp %53 : vector<16x16xf32>
      %cst_27 = arith.constant dense<0.000000e+00> : vector<16xf32>
      %55 = vector.multi_reduction <add>, %54, %cst_27 [1] : vector<16x16xf32> to vector<16xf32>
      %56 = vector.shape_cast %55 : vector<16xf32> to vector<16x1xf32>
      %57 = math.log %56 : vector<16x1xf32>
      %58 = arith.addf %57, %51 : vector<16x1xf32>
      %59 = vector.shape_cast %58 : vector<16x1xf32> to vector<1x16x1xf32>
      %cst_28 = arith.constant dense<0.000000e+00> : vector<1xf32>
      %60 = vector.multi_reduction <add>, %59, %cst_28 [1, 2] : vector<1x16x1xf32> to vector<1xf32>
      %61 = vector.shape_cast %60 : vector<1xf32> to vector<1x1x1xf32>
      %62 = vector.extract %61[0, 0, 0] : f32 from vector<1x1x1xf32>
      %63 = vector.broadcast %62 : f32 to vector<1x1xf32>
      %cst_29 = arith.constant 2.000000e+00 : f32
      %cst_30 = arith.constant 2.000000e+00 : f32
      %64 = arith.mulf %cst_29, %cst_30 : f32
      %65 = vector.broadcast %64 : f32 to vector<1x1xf32>
      %66 = arith.mulf %65, %44 : vector<1x1xf32>
      %67 = arith.subf %63, %66 : vector<1x1xf32>
      %cst_31 = arith.constant 6.250000e-02 : f32
      %68 = vector.broadcast %cst_31 : f32 to vector<1x1xf32>
      %69 = arith.mulf %67, %68 : vector<1x1xf32>
      %c0_32 = arith.constant 0 : index
      %c0_33 = arith.constant 0 : index
      %70 = vector.load %arg6[%c0_32, %c0_33] : memref<1x1xf32, #tpu.memory_space<vmem>>, vector<1x1xf32>
      tpu.vector_store %arg6[%c0_32, %c0_33], %69 {strides = array<i32>} : memref<1x1xf32, #tpu.memory_space<vmem>>, vector<1x1xf32>,
    } else {
    }
    return
  }
  func.func @transform_0(%arg0: i32) -> (i32, i32) {
    %c0_i32 = arith.constant 0 : i32
    %c0_i32_0 = arith.constant 0 : i32
    return %c0_i32, %arg0 : i32, i32
  }
  func.func @transform_1(%arg0: i32) -> (i32, i32) {
    %c0_i32 = arith.constant 0 : i32
    %c0_i32_0 = arith.constant 0 : i32
    return %arg0, %c0_i32 : i32, i32
  }
  func.func @transform_2(%arg0: i32) -> (i32, i32) {
    %c0_i32 = arith.constant 0 : i32
    %c0_i32_0 = arith.constant 0 : i32
    %c0_i32_1 = arith.constant 0 : i32
    return %c0_i32, %c0_i32_0 : i32, i32
  }
  func.func @transform_3(%arg0: i32) -> (i32, i32) {
    %c0_i32 = arith.constant 0 : i32
    %c0_i32_0 = arith.constant 0 : i32
    %c0_i32_1 = arith.constant 0 : i32
    return %c0_i32, %c0_i32_0 : i32, i32
  }
  func.func @transform_4(%arg0: i32) -> (i32, i32) {
    %c0_i32 = arith.constant 0 : i32
    %c0_i32_0 = arith.constant 0 : i32
    %c0_i32_1 = arith.constant 0 : i32
    return %c0_i32, %c0_i32_0 : i32, i32
  }
  func.func @transform_5(%arg0: i32) -> (i32, i32) {
    %c0_i32 = arith.constant 0 : i32
    %c0_i32_0 = arith.constant 0 : i32
    %c0_i32_1 = arith.constant 0 : i32
    return %c0_i32, %c0_i32_0 : i32, i32
  }
}

</mosaic_0001>

<llo_original>
// kernel: tpu_custom_call.1
$region0: #{tpu_custom_call.1}
  #allocation0 [shape = 'u32[]', space=smem, size = 0x4, offset = 0x4, fixed_abs, tag = 'smem constant byte address 0x4 - core index']
  #allocation1 [shape = 'u32[144,128]{1,0:T(1,128)}', space=vmem, size = 0x12000, scoped, tag = 'internal scratch']
  #allocation2 [shape = 'f32[16,256]{1,0:T(8,128)}', space=vmem, size = 0x4000, scoped, tag = 'scratch operand']
  %s0 = inlined_call_operand.hbm [shape: bf16[16,1024], index: 0, kind: input, shape index: {}]
  %s1 = inlined_call_operand.hbm [shape: bf16[1024,256], index: 1, kind: input, shape index: {}]
  %s2 = inlined_call_operand.vmem [shape: f32[1,256], index: 2, kind: input, shape index: {}]
  %s3 = inlined_call_operand.hbm [shape: bf16[256,128], index: 3, kind: input, shape index: {}]
  %s4 = inlined_call_operand.vmem [shape: f32[1,128], index: 4, kind: input, shape index: {}]
  %s5 = inlined_call_operand.hbm [shape: f32[1,1], index: 5, kind: output, shape index: {}]
  %s6 = sld [smem:[#allocation0]]
  $region50: #{tpu_custom_call.1} parent=0
    _
  %s8 = ssub.s32 1, %s6
  %s9 = scalar_select 0, %s8, %s6
  $region1: #{tpu_custom_call.1} parent=0
    #allocation3 [shape = 'u8[32768]{0}', space=vmem, size = 0x8000, scoped, tag = 'input window, operand 0, single buffered']
    #allocation4 [shape = 's32[1]{0}', space=sflag, size = 0x4, scoped, tag = 'scoped memory for tpu_custom_call.1']
    #allocation5 [shape = 's32[1]{0}', space=sflag, size = 0x4, scoped, tag = 'scoped memory for tpu_custom_call.1']
    #allocation6 [shape = 'u8[524288]{0}', space=vmem, size = 0x80000, scoped, tag = 'input window, operand 1, single buffered']
    #allocation7 [shape = 's32[1]{0}', space=sflag, size = 0x4, scoped, tag = 'scoped memory for tpu_custom_call.1']
    #allocation8 [shape = 'u8[65536]{0}', space=vmem, size = 0x10000, scoped, tag = 'input window, operand 3, single buffered']
    #allocation9 [shape = 'u8[512]{0}', space=vmem, size = 0x400, scoped, tag = 'output window, operand 0, single buffered']
    %10 = vsyncpa [#allocation4], 0
    %11 = vsyncpa [#allocation7], 0
    %12 = vsyncpa [#allocation5], 0
    // Predicated region
    $region2: #{tpu_custom_call.1} parent=1 // pred_check
      _
    $region3: #{tpu_custom_call.1} parent=1 // pred_check_branch
      %14 = sbr.rel (0) target = $region5
    $region4: #{tpu_custom_call.1} parent=1 // pred_region
      %s16 = ssub.s32 1024, 1024
      %17 = vsyncadd [#allocation4], %s16
      %s18 = sshll.u32 [#allocation3], 4
      %s19 = int_to_ptr.vmem [resolvable:$true] %s18
      %24 = dma.hbm_to_vmem [thread:$0]  %s0, 1024, %s19, [#allocation4], 512, 512, 32
    $region5: #{tpu_custom_call.1} parent=1 // pred_fallthru
      _
    // Predicated region
    $region6: #{tpu_custom_call.1} parent=1 // pred_check
      _
    $region7: #{tpu_custom_call.1} parent=1 // pred_check_branch
      %26 = sbr.rel (0) target = $region9
    $region8: #{tpu_custom_call.1} parent=1 // pred_region
      %s28 = ssub.s32 16384, 16384
      %29 = vsyncadd [#allocation7], %s28
      %s30 = sshll.u32 [#allocation6], 4
      %s31 = int_to_ptr.vmem [resolvable:$true] %s30
      %36 = dma.hbm_to_vmem [thread:$0]  %s1, 16384, %s31, [#allocation7], 128, 128, 8
    $region9: #{tpu_custom_call.1} parent=1 // pred_fallthru
      _
    // Predicated region
    $region10: #{tpu_custom_call.1} parent=1 // pred_check
      _
    $region11: #{tpu_custom_call.1} parent=1 // pred_check_branch
      %38 = sbr.rel (0) target = $region13
    $region12: #{tpu_custom_call.1} parent=1 // pred_region
      _
    $region13: #{tpu_custom_call.1} parent=1 // pred_fallthru
      _
    // Predicated region
    $region14: #{tpu_custom_call.1} parent=1 // pred_check
      _
    $region15: #{tpu_custom_call.1} parent=1 // pred_check_branch
      %40 = sbr.rel (0) target = $region17
    $region16: #{tpu_custom_call.1} parent=1 // pred_region
      %s42 = ssub.s32 2048, 2048
      %43 = vsyncadd [#allocation7], %s42
      %s44 = sshll.u32 [#allocation8], 4
      %s45 = int_to_ptr.vmem [resolvable:$true] %s44
      %50 = dma.hbm_to_vmem [thread:$0]  %s3, 2048, %s45, [#allocation7], 64, 64, 4
    $region17: #{tpu_custom_call.1} parent=1 // pred_fallthru
      _
    // Predicated region
    $region18: #{tpu_custom_call.1} parent=1 // pred_check
      _
    $region19: #{tpu_custom_call.1} parent=1 // pred_check_branch
      %52 = sbr.rel (0) target = $region21
    $region20: #{tpu_custom_call.1} parent=1 // pred_region
      _
    $region21: #{tpu_custom_call.1} parent=1 // pred_fallthru
      _
    // Predicated region
    $region22: #{tpu_custom_call.1} parent=1 // pred_check
      _
    $region23: #{tpu_custom_call.1} parent=1 // pred_check_branch
      %54 = sbr.rel (0) target = $region25
    $region24: #{tpu_custom_call.1} parent=1 // pred_region
      %55 = dma.done [#allocation4], 1024
    $region25: #{tpu_custom_call.1} parent=1 // pred_fallthru
      _
    // Predicated region
    $region26: #{tpu_custom_call.1} parent=1 // pred_check
      _
    $region27: #{tpu_custom_call.1} parent=1 // pred_check_branch
      %57 = sbr.rel (0) target = $region29
    $region28: #{tpu_custom_call.1} parent=1 // pred_region
      %58 = dma.done [#allocation7], 16384
    $region29: #{tpu_custom_call.1} parent=1 // pred_fallthru
      _
    // Predicated region
    $region30: #{tpu_custom_call.1} parent=1 // pred_check
      _
    $region31: #{tpu_custom_call.1} parent=1 // pred_check_branch
      %60 = sbr.rel (0) target = $region33
    $region32: #{tpu_custom_call.1} parent=1 // pred_region
      %61 = dma.done [#allocation7], 2048
    $region33: #{tpu_custom_call.1} parent=1 // pred_fallthru
      _
    %p63 = scmp.eq.s32.totalorder 0, 0
    // Predicated region
    $region34: #{tpu_custom_call.1} parent=1 // pred_check
      %p64 = pneg %p63
    $region35: #{tpu_custom_call.1} parent=1 // pred_check_branch
      %66 = sbr.rel (%p64) target = $region37
    $region36: #{tpu_custom_call.1} parent=1 // pred_region
      %67 = vst [vmem:[#allocation2] sm:$0xff] 0.0
      %68 = vst [vmem:[#allocation2 + $0x8] sm:$0xff] 0.0
      %69 = vst [vmem:[#allocation2 + $0x10] sm:$0xff] 0.0
      %70 = vst [vmem:[#allocation2 + $0x18] sm:$0xff] 0.0
    $region37: #{tpu_custom_call.1} parent=1 // pred_fallthru
      _
    %v71 = vld [vmem:[#allocation2] sm:$0xff]
    %v72 = vld [vmem:[#allocation2 + $0x8] sm:$0xff]
    %v73 = vld [vmem:[#allocation2 + $0x10] sm:$0xff]
    %v74 = vld [vmem:[#allocation2 + $0x18] sm:$0xff]
    %v75 = vld [vmem:[#allocation3] sm:$0xff]
    %v76 = vld [vmem:[#allocation3 + $0x8] sm:$0xff]
    %v77 = vld [vmem:[#allocation3 + $0x10] sm:$0xff]
    %v78 = vld [vmem:[#allocation3 + $0x18] sm:$0xff]
    %v79 = vld [vmem:[#allocation3 + $0x20] sm:$0xff]
    %v80 = vld [vmem:[#allocation3 + $0x28] sm:$0xff]
    %v81 = vld [vmem:[#allocation3 + $0x30] sm:$0xff]
    %v82 = vld [vmem:[#allocation3 + $0x38] sm:$0xff]
    %v83 = vld [vmem:[#allocation6] sm:$0xff]
    %v84 = vld [vmem:[#allocation6 + $0x8] sm:$0xff]
    %v85 = vld [vmem:[#allocation6 + $0x10] sm:$0xff]
    %v86 = vld [vmem:[#allocation6 + $0x18] sm:$0xff]
    %v87 = vld [vmem:[#allocation6 + $0x20] sm:$0xff]
    %v88 = vld [vmem:[#allocation6 + $0x28] sm:$0xff]
    %v89 = vld [vmem:[#allocation6 + $0x30] sm:$0xff]
    %v90 = vld [vmem:[#allocation6 + $0x38] sm:$0xff]
    %v91 = vld [vmem:[#allocation6 + $0x40] sm:$0xff]
    %v92 = vld [vmem:[#allocation6 + $0x48] sm:$0xff]
    %v93 = vld [vmem:[#allocation6 + $0x50] sm:$0xff]
    %v94 = vld [vmem:[#allocation6 + $0x58] sm:$0xff]
    %v95 = vld [vmem:[#allocation6 + $0x60] sm:$0xff]
    %v96 = vld [vmem:[#allocation6 + $0x68] sm:$0xff]
    %v97 = vld [vmem:[#allocation6 + $0x70] sm:$0xff]
    %v98 = vld [vmem:[#allocation6 + $0x78] sm:$0xff]
    %v99 = vld [vmem:[#allocation6 + $0x80] sm:$0xff]
    %v100 = vld [vmem:[#allocation6 + $0x88] sm:$0xff]
    %v101 = vld [vmem:[#allocation6 + $0x90] sm:$0xff]
    %v102 = vld [vmem:[#allocation6 + $0x98] sm:$0xff]
    %v103 = vld [vmem:[#allocation6 + $0xa0] sm:$0xff]
    %v104 = vld [vmem:[#allocation6 + $0xa8] sm:$0xff]
    %v105 = vld [vmem:[#allocation6 + $0xb0] sm:$0xff]
    %v106 = vld [vmem:[#allocation6 + $0xb8] sm:$0xff]
    %v107 = vld [vmem:[#allocation6 + $0xc0] sm:$0xff]
    %v108 = vld [vmem:[#allocation6 + $0xc8] sm:$0xff]
    %v109 = vld [vmem:[#allocation6 + $0xd0] sm:$0xff]
    %v110 = vld [vmem:[#allocation6 + $0xd8] sm:$0xff]
    %v111 = vld [vmem:[#allocation6 + $0xe0] sm:$0xff]
    %v112 = vld [vmem:[#allocation6 + $0xe8] sm:$0xff]
    %v113 = vld [vmem:[#allocation6 + $0xf0] sm:$0xff]
    %v114 = vld [vmem:[#allocation6 + $0xf8] sm:$0xff]
    %v115 = vld [vmem:[#allocation6 + $0x100] sm:$0xff]
    %v116 = vld [vmem:[#allocation6 + $0x108] sm:$0xff]
    %v117 = vld [vmem:[#allocation6 + $0x110] sm:$0xff]
    %v118 = vld [vmem:[#allocation6 + $0x118] sm:$0xff]
    %v119 = vld [vmem:[#allocation6 + $0x120] sm:$0xff]
    %v120 = vld [vmem:[#allocation6 + $0x128] sm:$0xff]
    %v121 = vld [vmem:[#allocation6 + $0x130] sm:$0xff]
    %v122 = vld [vmem:[#allocation6 + $0x138] sm:$0xff]
    %v123 = vld [vmem:[#allocation6 + $0x140] sm:$0xff]
    %v124 = vld [vmem:[#allocation6 + $0x148] sm:$0xff]
    %v125 = vld [vmem:[#allocation6 + $0x150] sm:$0xff]
    %v126 = vld [vmem:[#allocation6 + $0x158] sm:$0xff]
    %v127 = vld [vmem:[#allocation6 + $0x160] sm:$0xff]
    %v128 = vld [vmem:[#allocation6 + $0x168] sm:$0xff]
    %v129 = vld [vmem:[#allocation6 + $0x170] sm:$0xff]
    %v130 = vld [vmem:[#allocation6 + $0x178] sm:$0xff]
    %v131 = vld [vmem:[#allocation6 + $0x180] sm:$0xff]
    %v132 = vld [vmem:[#allocation6 + $0x188] sm:$0xff]
    %v133 = vld [vmem:[#allocation6 + $0x190] sm:$0xff]
    %v134 = vld [vmem:[#allocation6 + $0x198] sm:$0xff]
    %v135 = vld [vmem:[#allocation6 + $0x1a0] sm:$0xff]
    %v136 = vld [vmem:[#allocation6 + $0x1a8] sm:$0xff]
    %v137 = vld [vmem:[#allocation6 + $0x1b0] sm:$0xff]
    %v138 = vld [vmem:[#allocation6 + $0x1b8] sm:$0xff]
    %v139 = vld [vmem:[#allocation6 + $0x1c0] sm:$0xff]
    %v140 = vld [vmem:[#allocation6 + $0x1c8] sm:$0xff]
    %v141 = vld [vmem:[#allocation6 + $0x1d0] sm:$0xff]
    %v142 = vld [vmem:[#allocation6 + $0x1d8] sm:$0xff]
    %v143 = vld [vmem:[#allocation6 + $0x1e0] sm:$0xff]
    %v144 = vld [vmem:[#allocation6 + $0x1e8] sm:$0xff]
    %v145 = vld [vmem:[#allocation6 + $0x1f0] sm:$0xff]
    %v146 = vld [vmem:[#allocation6 + $0x1f8] sm:$0xff]
    %v147 = vld [vmem:[#allocation6 + $0x200] sm:$0xff]
    %v148 = vld [vmem:[#allocation6 + $0x208] sm:$0xff]
    %v149 = vld [vmem:[#allocation6 + $0x210] sm:$0xff]
    %v150 = vld [vmem:[#allocation6 + $0x218] sm:$0xff]
    %v151 = vld [vmem:[#allocation6 + $0x220] sm:$0xff]
    %v152 = vld [vmem:[#allocation6 + $0x228] sm:$0xff]
    %v153 = vld [vmem:[#allocation6 + $0x230] sm:$0xff]
    %v154 = vld [vmem:[#allocation6 + $0x238] sm:$0xff]
    %v155 = vld [vmem:[#allocation6 + $0x240] sm:$0xff]
    %v156 = vld [vmem:[#allocation6 + $0x248] sm:$0xff]
    %v157 = vld [vmem:[#allocation6 + $0x250] sm:$0xff]
    %v158 = vld [vmem:[#allocation6 + $0x258] sm:$0xff]
    %v159 = vld [vmem:[#allocation6 + $0x260] sm:$0xff]
    %v160 = vld [vmem:[#allocation6 + $0x268] sm:$0xff]
    %v161 = vld [vmem:[#allocation6 + $0x270] sm:$0xff]
    %v162 = vld [vmem:[#allocation6 + $0x278] sm:$0xff]
    %v163 = vld [vmem:[#allocation6 + $0x280] sm:$0xff]
    %v164 = vld [vmem:[#allocation6 + $0x288] sm:$0xff]
    %v165 = vld [vmem:[#allocation6 + $0x290] sm:$0xff]
    %v166 = vld [vmem:[#allocation6 + $0x298] sm:$0xff]
    %v167 = vld [vmem:[#allocation6 + $0x2a0] sm:$0xff]
    %v168 = vld [vmem:[#allocation6 + $0x2a8] sm:$0xff]
    %v169 = vld [vmem:[#allocation6 + $0x2b0] sm:$0xff]
    %v170 = vld [vmem:[#allocation6 + $0x2b8] sm:$0xff]
    %v171 = vld [vmem:[#allocation6 + $0x2c0] sm:$0xff]
    %v172 = vld [vmem:[#allocation6 + $0x2c8] sm:$0xff]
    %v173 = vld [vmem:[#allocation6 + $0x2d0] sm:$0xff]
    %v174 = vld [vmem:[#allocation6 + $0x2d8] sm:$0xff]
    %v175 = vld [vmem:[#allocation6 + $0x2e0] sm:$0xff]
    %v176 = vld [vmem:[#allocation6 + $0x2e8] sm:$0xff]
    %v177 = vld [vmem:[#allocation6 + $0x2f0] sm:$0xff]
    %v178 = vld [vmem:[#allocation6 + $0x2f8] sm:$0xff]
    %v179 = vld [vmem:[#allocation6 + $0x300] sm:$0xff]
    %v180 = vld [vmem:[#allocation6 + $0x308] sm:$0xff]
    %v181 = vld [vmem:[#allocation6 + $0x310] sm:$0xff]
    %v182 = vld [vmem:[#allocation6 + $0x318] sm:$0xff]
    %v183 = vld [vmem:[#allocation6 + $0x320] sm:$0xff]
    %v184 = vld [vmem:[#allocation6 + $0x328] sm:$0xff]
    %v185 = vld [vmem:[#allocation6 + $0x330] sm:$0xff]
    %v186 = vld [vmem:[#allocation6 + $0x338] sm:$0xff]
    %v187 = vld [vmem:[#allocation6 + $0x340] sm:$0xff]
    %v188 = vld [vmem:[#allocation6 + $0x348] sm:$0xff]
    %v189 = vld [vmem:[#allocation6 + $0x350] sm:$0xff]
    %v190 = vld [vmem:[#allocation6 + $0x358] sm:$0xff]
    %v191 = vld [vmem:[#allocation6 + $0x360] sm:$0xff]
    %v192 = vld [vmem:[#allocation6 + $0x368] sm:$0xff]
    %v193 = vld [vmem:[#allocation6 + $0x370] sm:$0xff]
    %v194 = vld [vmem:[#allocation6 + $0x378] sm:$0xff]
    %v195 = vld [vmem:[#allocation6 + $0x380] sm:$0xff]
    %v196 = vld [vmem:[#allocation6 + $0x388] sm:$0xff]
    %v197 = vld [vmem:[#allocation6 + $0x390] sm:$0xff]
    %v198 = vld [vmem:[#allocation6 + $0x398] sm:$0xff]
    %v199 = vld [vmem:[#allocation6 + $0x3a0] sm:$0xff]
    %v200 = vld [vmem:[#allocation6 + $0x3a8] sm:$0xff]
    %v201 = vld [vmem:[#allocation6 + $0x3b0] sm:$0xff]
    %v202 = vld [vmem:[#allocation6 + $0x3b8] sm:$0xff]
    %v203 = vld [vmem:[#allocation6 + $0x3c0] sm:$0xff]
    %v204 = vld [vmem:[#allocation6 + $0x3c8] sm:$0xff]
    %v205 = vld [vmem:[#allocation6 + $0x3d0] sm:$0xff]
    %v206 = vld [vmem:[#allocation6 + $0x3d8] sm:$0xff]
    %v207 = vld [vmem:[#allocation6 + $0x3e0] sm:$0xff]
    %v208 = vld [vmem:[#allocation6 + $0x3e8] sm:$0xff]
    %v209 = vld [vmem:[#allocation6 + $0x3f0] sm:$0xff]
    %v210 = vld [vmem:[#allocation6 + $0x3f8] sm:$0xff]
    %v219 = vunpack.c.l.b16 %v75
    %v220 = vunpack.c.h.b16 %v75
    %v221 = vunpack.c.l.b16 %v76
    %v222 = vunpack.c.h.b16 %v76
    %v223 = vunpack.c.l.b16 %v77
    %v224 = vunpack.c.h.b16 %v77
    %v225 = vunpack.c.l.b16 %v78
    %v226 = vunpack.c.h.b16 %v78
    %v227 = vunpack.c.l.b16 %v79
    %v228 = vunpack.c.h.b16 %v79
    %v229 = vunpack.c.l.b16 %v80
    %v230 = vunpack.c.h.b16 %v80
    %v231 = vunpack.c.l.b16 %v81
    %v232 = vunpack.c.h.b16 %v81
    %v233 = vunpack.c.l.b16 %v82
    %v234 = vunpack.c.h.b16 %v82
    %v235 = vpack.c.b16 %v227, %v219
    %v236 = vpack.c.b16 %v228, %v220
    %v237 = vpack.c.b16 %v229, %v221
    %v238 = vpack.c.b16 %v230, %v222
    %v239 = vpack.c.b16 %v231, %v223
    %v240 = vpack.c.b16 %v232, %v224
    %v241 = vpack.c.b16 %v233, %v225
    %v242 = vpack.c.b16 %v234, %v226
    %v379 = vunpack.c.l.b16 %v83
    %v380 = vunpack.c.h.b16 %v83
    %v381 = vunpack.c.l.b16 %v84
    %v382 = vunpack.c.h.b16 %v84
    %v383 = vunpack.c.l.b16 %v85
    %v384 = vunpack.c.h.b16 %v85
    %v385 = vunpack.c.l.b16 %v86
    %v386 = vunpack.c.h.b16 %v86
    %v387 = vunpack.c.l.b16 %v87
    %v388 = vunpack.c.h.b16 %v87
    %v389 = vunpack.c.l.b16 %v88
    %v390 = vunpack.c.h.b16 %v88
    %v391 = vunpack.c.l.b16 %v89
    %v392 = vunpack.c.h.b16 %v89
    %v393 = vunpack.c.l.b16 %v90
    %v394 = vunpack.c.h.b16 %v90
    %v395 = vunpack.c.l.b16 %v91
    %v396 = vunpack.c.h.b16 %v91
    %v397 = vunpack.c.l.b16 %v92
    %v398 = vunpack.c.h.b16 %v92
    %v399 = vunpack.c.l.b16 %v93
    %v400 = vunpack.c.h.b16 %v93
    %v401 = vunpack.c.l.b16 %v94
    %v402 = vunpack.c.h.b16 %v94
    %v403 = vunpack.c.l.b16 %v95
    %v404 = vunpack.c.h.b16 %v95
    %v405 = vunpack.c.l.b16 %v96
    %v406 = vunpack.c.h.b16 %v96
    %v407 = vunpack.c.l.b16 %v97
    %v408 = vunpack.c.h.b16 %v97
    %v409 = vunpack.c.l.b16 %v98
    %v410 = vunpack.c.h.b16 %v98
    %v411 = vunpack.c.l.b16 %v99
    %v412 = vunpack.c.h.b16 %v99
    %v413 = vunpack.c.l.b16 %v100
    %v414 = vunpack.c.h.b16 %v100
    %v415 = vunpack.c.l.b16 %v101
    %v416 = vunpack.c.h.b16 %v101
    %v417 = vunpack.c.l.b16 %v102
    %v418 = vunpack.c.h.b16 %v102
    %v419 = vunpack.c.l.b16 %v103
    %v420 = vunpack.c.h.b16 %v103
    %v421 = vunpack.c.l.b16 %v104
    %v422 = vunpack.c.h.b16 %v104
    %v423 = vunpack.c.l.b16 %v105
    %v424 = vunpack.c.h.b16 %v105
    %v425 = vunpack.c.l.b16 %v106
    %v426 = vunpack.c.h.b16 %v106
    %v427 = vunpack.c.l.b16 %v107
    %v428 = vunpack.c.h.b16 %v107
    %v429 = vunpack.c.l.b16 %v108
    %v430 = vunpack.c.h.b16 %v108
    %v431 = vunpack.c.l.b16 %v109
    %v432 = vunpack.c.h.b16 %v109
    %v433 = vunpack.c.l.b16 %v110
    %v434 = vunpack.c.h.b16 %v110
    %v435 = vunpack.c.l.b16 %v111
    %v436 = vunpack.c.h.b16 %v111
    %v437 = vunpack.c.l.b16 %v112
    %v438 = vunpack.c.h.b16 %v112
    %v439 = vunpack.c.l.b16 %v113
    %v440 = vunpack.c.h.b16 %v113
    %v441 = vunpack.c.l.b16 %v114
    %v442 = vunpack.c.h.b16 %v114
    %v443 = vunpack.c.l.b16 %v115
    %v444 = vunpack.c.h.b16 %v115
    %v445 = vunpack.c.l.b16 %v116
    %v446 = vunpack.c.h.b16 %v116
    %v447 = vunpack.c.l.b16 %v117
    %v448 = vunpack.c.h.b16 %v117
    %v449 = vunpack.c.l.b16 %v118
    %v450 = vunpack.c.h.b16 %v118
    %v451 = vunpack.c.l.b16 %v119
    %v452 = vunpack.c.h.b16 %v119
    %v453 = vunpack.c.l.b16 %v120
    %v454 = vunpack.c.h.b16 %v120
    %v455 = vunpack.c.l.b16 %v121
    %v456 = vunpack.c.h.b16 %v121
    %v457 = vunpack.c.l.b16 %v122
    %v458 = vunpack.c.h.b16 %v122
    %v459 = vunpack.c.l.b16 %v123
    %v460 = vunpack.c.h.b16 %v123
    %v461 = vunpack.c.l.b16 %v124
    %v462 = vunpack.c.h.b16 %v124
    %v463 = vunpack.c.l.b16 %v125
    %v464 = vunpack.c.h.b16 %v125
    %v465 = vunpack.c.l.b16 %v126
    %v466 = vunpack.c.h.b16 %v126
    %v467 = vunpack.c.l.b16 %v127
    %v468 = vunpack.c.h.b16 %v127
    %v469 = vunpack.c.l.b16 %v128
    %v470 = vunpack.c.h.b16 %v128
    %v471 = vunpack.c.l.b16 %v129
    %v472 = vunpack.c.h.b16 %v129
    %v473 = vunpack.c.l.b16 %v130
    %v474 = vunpack.c.h.b16 %v130
    %v475 = vunpack.c.l.b16 %v131
    %v476 = vunpack.c.h.b16 %v131
    %v477 = vunpack.c.l.b16 %v132
    %v478 = vunpack.c.h.b16 %v132
    %v479 = vunpack.c.l.b16 %v133
    %v480 = vunpack.c.h.b16 %v133
    %v481 = vunpack.c.l.b16 %v134
    %v482 = vunpack.c.h.b16 %v134
    %v483 = vunpack.c.l.b16 %v135
    %v484 = vunpack.c.h.b16 %v135
    %v485 = vunpack.c.l.b16 %v136
    %v486 = vunpack.c.h.b16 %v136
    %v487 = vunpack.c.l.b16 %v137
    %v488 = vunpack.c.h.b16 %v137
    %v489 = vunpack.c.l.b16 %v138
    %v490 = vunpack.c.h.b16 %v138
    %v491 = vunpack.c.l.b16 %v139
    %v492 = vunpack.c.h.b16 %v139
    %v493 = vunpack.c.l.b16 %v140
    %v494 = vunpack.c.h.b16 %v140
    %v495 = vunpack.c.l.b16 %v141
    %v496 = vunpack.c.h.b16 %v141
    %v497 = vunpack.c.l.b16 %v142
    %v498 = vunpack.c.h.b16 %v142
    %v499 = vunpack.c.l.b16 %v143
    %v500 = vunpack.c.h.b16 %v143
    %v501 = vunpack.c.l.b16 %v144
    %v502 = vunpack.c.h.b16 %v144
    %v503 = vunpack.c.l.b16 %v145
    %v504 = vunpack.c.h.b16 %v145
    %v505 = vunpack.c.l.b16 %v146
    %v506 = vunpack.c.h.b16 %v146
    %v507 = vunpack.c.l.b16 %v147
    %v508 = vunpack.c.h.b16 %v147
    %v509 = vunpack.c.l.b16 %v148
    %v510 = vunpack.c.h.b16 %v148
    %v511 = vunpack.c.l.b16 %v149
    %v512 = vunpack.c.h.b16 %v149
    %v513 = vunpack.c.l.b16 %v150
    %v514 = vunpack.c.h.b16 %v150
    %v515 = vunpack.c.l.b16 %v151
    %v516 = vunpack.c.h.b16 %v151
    %v517 = vunpack.c.l.b16 %v152
    %v518 = vunpack.c.h.b16 %v152
    %v519 = vunpack.c.l.b16 %v153
    %v520 = vunpack.c.h.b16 %v153
    %v521 = vunpack.c.l.b16 %v154
    %v522 = vunpack.c.h.b16 %v154
    %v523 = vunpack.c.l.b16 %v155
    %v524 = vunpack.c.h.b16 %v155
    %v525 = vunpack.c.l.b16 %v156
    %v526 = vunpack.c.h.b16 %v156
    %v527 = vunpack.c.l.b16 %v157
    %v528 = vunpack.c.h.b16 %v157
    %v529 = vunpack.c.l.b16 %v158
    %v530 = vunpack.c.h.b16 %v158
    %v531 = vunpack.c.l.b16 %v159
    %v532 = vunpack.c.h.b16 %v159
    %v533 = vunpack.c.l.b16 %v160
    %v534 = vunpack.c.h.b16 %v160
    %v535 = vunpack.c.l.b16 %v161
    %v536 = vunpack.c.h.b16 %v161
    %v537 = vunpack.c.l.b16 %v162
    %v538 = vunpack.c.h.b16 %v162
    %v539 = vunpack.c.l.b16 %v163
    %v540 = vunpack.c.h.b16 %v163
    %v541 = vunpack.c.l.b16 %v164
    %v542 = vunpack.c.h.b16 %v164
    %v543 = vunpack.c.l.b16 %v165
    %v544 = vunpack.c.h.b16 %v165
    %v545 = vunpack.c.l.b16 %v166
    %v546 = vunpack.c.h.b16 %v166
    %v547 = vunpack.c.l.b16 %v167
    %v548 = vunpack.c.h.b16 %v167
    %v549 = vunpack.c.l.b16 %v168
    %v550 = vunpack.c.h.b16 %v168
    %v551 = vunpack.c.l.b16 %v169
    %v552 = vunpack.c.h.b16 %v169
    %v553 = vunpack.c.l.b16 %v170
    %v554 = vunpack.c.h.b16 %v170
    %v555 = vunpack.c.l.b16 %v171
    %v556 = vunpack.c.h.b16 %v171
    %v557 = vunpack.c.l.b16 %v172
    %v558 = vunpack.c.h.b16 %v172
    %v559 = vunpack.c.l.b16 %v173
    %v560 = vunpack.c.h.b16 %v173
    %v561 = vunpack.c.l.b16 %v174
    %v562 = vunpack.c.h.b16 %v174
    %v563 = vunpack.c.l.b16 %v175
    %v564 = vunpack.c.h.b16 %v175
    %v565 = vunpack.c.l.b16 %v176
    %v566 = vunpack.c.h.b16 %v176
    %v567 = vunpack.c.l.b16 %v177
    %v568 = vunpack.c.h.b16 %v177
    %v569 = vunpack.c.l.b16 %v178
    %v570 = vunpack.c.h.b16 %v178
    %v571 = vunpack.c.l.b16 %v179
    %v572 = vunpack.c.h.b16 %v179
    %v573 = vunpack.c.l.b16 %v180
    %v574 = vunpack.c.h.b16 %v180
    %v575 = vunpack.c.l.b16 %v181
    %v576 = vunpack.c.h.b16 %v181
    %v577 = vunpack.c.l.b16 %v182
    %v578 = vunpack.c.h.b16 %v182
    %v579 = vunpack.c.l.b16 %v183
    %v580 = vunpack.c.h.b16 %v183
    %v581 = vunpack.c.l.b16 %v184
    %v582 = vunpack.c.h.b16 %v184
    %v583 = vunpack.c.l.b16 %v185
    %v584 = vunpack.c.h.b16 %v185
    %v585 = vunpack.c.l.b16 %v186
    %v586 = vunpack.c.h.b16 %v186
    %v587 = vunpack.c.l.b16 %v187
    %v588 = vunpack.c.h.b16 %v187
    %v589 = vunpack.c.l.b16 %v188
    %v590 = vunpack.c.h.b16 %v188
    %v591 = vunpack.c.l.b16 %v189
    %v592 = vunpack.c.h.b16 %v189
    %v593 = vunpack.c.l.b16 %v190
    %v594 = vunpack.c.h.b16 %v190
    %v595 = vunpack.c.l.b16 %v191
    %v596 = vunpack.c.h.b16 %v191
    %v597 = vunpack.c.l.b16 %v192
    %v598 = vunpack.c.h.b16 %v192
    %v599 = vunpack.c.l.b16 %v193
    %v600 = vunpack.c.h.b16 %v193
    %v601 = vunpack.c.l.b16 %v194
    %v602 = vunpack.c.h.b16 %v194
    %v603 = vunpack.c.l.b16 %v195
    %v604 = vunpack.c.h.b16 %v195
    %v605 = vunpack.c.l.b16 %v196
    %v606 = vunpack.c.h.b16 %v196
    %v607 = vunpack.c.l.b16 %v197
    %v608 = vunpack.c.h.b16 %v197
    %v609 = vunpack.c.l.b16 %v198
    %v610 = vunpack.c.h.b16 %v198
    %v611 = vunpack.c.l.b16 %v199
    %v612 = vunpack.c.h.b16 %v199
    %v613 = vunpack.c.l.b16 %v200
    %v614 = vunpack.c.h.b16 %v200
    %v615 = vunpack.c.l.b16 %v201
    %v616 = vunpack.c.h.b16 %v201
    %v617 = vunpack.c.l.b16 %v202
    %v618 = vunpack.c.h.b16 %v202
    %v619 = vunpack.c.l.b16 %v203
    %v620 = vunpack.c.h.b16 %v203
    %v621 = vunpack.c.l.b16 %v204
    %v622 = vunpack.c.h.b16 %v204
    %v623 = vunpack.c.l.b16 %v205
    %v624 = vunpack.c.h.b16 %v205
    %v625 = vunpack.c.l.b16 %v206
    %v626 = vunpack.c.h.b16 %v206
    %v627 = vunpack.c.l.b16 %v207
    %v628 = vunpack.c.h.b16 %v207
    %v629 = vunpack.c.l.b16 %v208
    %v630 = vunpack.c.h.b16 %v208
    %v631 = vunpack.c.l.b16 %v209
    %v632 = vunpack.c.h.b16 %v209
    %v633 = vunpack.c.l.b16 %v210
    %v634 = vunpack.c.h.b16 %v210
    %v635 = vpack.c.b16 %v381, %v379
    %v636 = vpack.c.b16 %v382, %v380
    %v637 = vpack.c.b16 %v385, %v383
    %v638 = vpack.c.b16 %v386, %v384
    %v639 = vpack.c.b16 %v389, %v387
    %v640 = vpack.c.b16 %v390, %v388
    %v641 = vpack.c.b16 %v393, %v391
    %v642 = vpack.c.b16 %v394, %v392
    %v643 = vpack.c.b16 %v397, %v395
    %v644 = vpack.c.b16 %v398, %v396
    %v645 = vpack.c.b16 %v401, %v399
    %v646 = vpack.c.b16 %v402, %v400
    %v647 = vpack.c.b16 %v405, %v403
    %v648 = vpack.c.b16 %v406, %v404
    %v649 = vpack.c.b16 %v409, %v407
    %v650 = vpack.c.b16 %v410, %v408
    %v651 = vpack.c.b16 %v413, %v411
    %v652 = vpack.c.b16 %v414, %v412
    %v653 = vpack.c.b16 %v417, %v415
    %v654 = vpack.c.b16 %v418, %v416
    %v655 = vpack.c.b16 %v421, %v419
    %v656 = vpack.c.b16 %v422, %v420
    %v657 = vpack.c.b16 %v425, %v423
    %v658 = vpack.c.b16 %v426, %v424
    %v659 = vpack.c.b16 %v429, %v427
    %v660 = vpack.c.b16 %v430, %v428
    %v661 = vpack.c.b16 %v433, %v431
    %v662 = vpack.c.b16 %v434, %v432
    %v663 = vpack.c.b16 %v437, %v435
    %v664 = vpack.c.b16 %v438, %v436
    %v665 = vpack.c.b16 %v441, %v439
    %v666 = vpack.c.b16 %v442, %v440
    %v667 = vpack.c.b16 %v445, %v443
    %v668 = vpack.c.b16 %v446, %v444
    %v669 = vpack.c.b16 %v449, %v447
    %v670 = vpack.c.b16 %v450, %v448
    %v671 = vpack.c.b16 %v453, %v451
    %v672 = vpack.c.b16 %v454, %v452
    %v673 = vpack.c.b16 %v457, %v455
    %v674 = vpack.c.b16 %v458, %v456
    %v675 = vpack.c.b16 %v461, %v459
    %v676 = vpack.c.b16 %v462, %v460
    %v677 = vpack.c.b16 %v465, %v463
    %v678 = vpack.c.b16 %v466, %v464
    %v679 = vpack.c.b16 %v469, %v467
    %v680 = vpack.c.b16 %v470, %v468
    %v681 = vpack.c.b16 %v473, %v471
    %v682 = vpack.c.b16 %v474, %v472
    %v683 = vpack.c.b16 %v477, %v475
    %v684 = vpack.c.b16 %v478, %v476
    %v685 = vpack.c.b16 %v481, %v479
    %v686 = vpack.c.b16 %v482, %v480
    %v687 = vpack.c.b16 %v485, %v483
    %v688 = vpack.c.b16 %v486, %v484
    %v689 = vpack.c.b16 %v489, %v487
    %v690 = vpack.c.b16 %v490, %v488
    %v691 = vpack.c.b16 %v493, %v491
    %v692 = vpack.c.b16 %v494, %v492
    %v693 = vpack.c.b16 %v497, %v495
    %v694 = vpack.c.b16 %v498, %v496
    %v695 = vpack.c.b16 %v501, %v499
    %v696 = vpack.c.b16 %v502, %v500
    %v697 = vpack.c.b16 %v505, %v503
    %v698 = vpack.c.b16 %v506, %v504
    %v699 = vpack.c.b16 %v509, %v507
    %v700 = vpack.c.b16 %v510, %v508
    %v701 = vpack.c.b16 %v513, %v511
    %v702 = vpack.c.b16 %v514, %v512
    %v703 = vpack.c.b16 %v517, %v515
    %v704 = vpack.c.b16 %v518, %v516
    %v705 = vpack.c.b16 %v521, %v519
    %v706 = vpack.c.b16 %v522, %v520
    %v707 = vpack.c.b16 %v525, %v523
    %v708 = vpack.c.b16 %v526, %v524
    %v709 = vpack.c.b16 %v529, %v527
    %v710 = vpack.c.b16 %v530, %v528
    %v711 = vpack.c.b16 %v533, %v531
    %v712 = vpack.c.b16 %v534, %v532
    %v713 = vpack.c.b16 %v537, %v535
    %v714 = vpack.c.b16 %v538, %v536
    %v715 = vpack.c.b16 %v541, %v539
    %v716 = vpack.c.b16 %v542, %v540
    %v717 = vpack.c.b16 %v545, %v543
    %v718 = vpack.c.b16 %v546, %v544
    %v719 = vpack.c.b16 %v549, %v547
    %v720 = vpack.c.b16 %v550, %v548
    %v721 = vpack.c.b16 %v553, %v551
    %v722 = vpack.c.b16 %v554, %v552
    %v723 = vpack.c.b16 %v557, %v555
    %v724 = vpack.c.b16 %v558, %v556
    %v725 = vpack.c.b16 %v561, %v559
    %v726 = vpack.c.b16 %v562, %v560
    %v727 = vpack.c.b16 %v565, %v563
    %v728 = vpack.c.b16 %v566, %v564
    %v729 = vpack.c.b16 %v569, %v567
    %v730 = vpack.c.b16 %v570, %v568
    %v731 = vpack.c.b16 %v573, %v571
    %v732 = vpack.c.b16 %v574, %v572
    %v733 = vpack.c.b16 %v577, %v575
    %v734 = vpack.c.b16 %v578, %v576
    %v735 = vpack.c.b16 %v581, %v579
    %v736 = vpack.c.b16 %v582, %v580
    %v737 = vpack.c.b16 %v585, %v583
    %v738 = vpack.c.b16 %v586, %v584
    %v739 = vpack.c.b16 %v589, %v587
    %v740 = vpack.c.b16 %v590, %v588
    %v741 = vpack.c.b16 %v593, %v591
    %v742 = vpack.c.b16 %v594, %v592
    %v743 = vpack.c.b16 %v597, %v595
    %v744 = vpack.c.b16 %v598, %v596
    %v745 = vpack.c.b16 %v601, %v599
    %v746 = vpack.c.b16 %v602, %v600
    %v747 = vpack.c.b16 %v605, %v603
    %v748 = vpack.c.b16 %v606, %v604
    %v749 = vpack.c.b16 %v609, %v607
    %v750 = vpack.c.b16 %v610, %v608
    %v751 = vpack.c.b16 %v613, %v611
    %v752 = vpack.c.b16 %v614, %v612
    %v753 = vpack.c.b16 %v617, %v615
    %v754 = vpack.c.b16 %v618, %v616
    %v755 = vpack.c.b16 %v621, %v619
    %v756 = vpack.c.b16 %v622, %v620
    %v757 = vpack.c.b16 %v625, %v623
    %v758 = vpack.c.b16 %v626, %v624
    %v759 = vpack.c.b16 %v629, %v627
    %v760 = vpack.c.b16 %v630, %v628
    %v761 = vpack.c.b16 %v633, %v631
    %v762 = vpack.c.b16 %v634, %v632
    %891 = vmatprep.subr.bf16.mxu0 %v650
    %892 = vmatpush1.bf16.msra.mxu0 %v649
    %893 = vmatprep.subr.bf16.mxu0 %v648
    %894 = vmatpush1.bf16.msra.mxu0 %v647
    %895 = vmatprep.subr.bf16.mxu0 %v646
    %896 = vmatpush1.bf16.msra.mxu0 %v645
    %897 = vmatprep.subr.bf16.mxu0 %v644
    %898 = vmatpush1.bf16.msra.mxu0 %v643
    %899 = vmatprep.subr.bf16.mxu0 %v642
    %900 = vmatpush1.bf16.msra.mxu0 %v641
    %901 = vmatprep.subr.bf16.mxu0 %v640
    %902 = vmatpush1.bf16.msra.mxu0 %v639
    %903 = vmatprep.subr.bf16.mxu0 %v638
    %904 = vmatpush1.bf16.msra.mxu0 %v637
    %905 = vmatprep.subr.bf16.mxu0 %v636
    %906 = vmatpush1.bf16.msra.mxu0 %v635
    %907 = vmatprep.subr.bf16.mxu0 %v666
    %908 = vmatpush2.bf16.msra.mxu0 %v665
    %909 = vmatprep.subr.bf16.mxu0 %v664
    %910 = vmatpush2.bf16.msra.mxu0 %v663
    %911 = vmatprep.subr.bf16.mxu0 %v662
    %912 = vmatpush2.bf16.msra.mxu0 %v661
    %913 = vmatprep.subr.bf16.mxu0 %v660
    %914 = vmatpush2.bf16.msra.mxu0 %v659
    %915 = vmatprep.subr.bf16.mxu0 %v658
    %916 = vmatpush2.bf16.msra.mxu0 %v657
    %917 = vmatprep.subr.bf16.mxu0 %v656
    %918 = vmatpush2.bf16.msra.mxu0 %v655
    %919 = vmatprep.subr.bf16.mxu0 %v654
    %920 = vmatpush2.bf16.msra.mxu0 %v653
    %921 = vmatprep.subr.bf16.mxu0 %v652
    %922 = vmatpush2.bf16.msra.mxu0 %v651
    %923 = vmatprep.mubr.bf16.mxu0 %v236
    %924 = vmatmul.mubr.bf16.gmra.mxu0 %v235
    %v925 = vpop.f32.mrf.mxu0
    %v926 = vadd.f32 0.0, %v925
    %v927 = vpop.f32.mrf.mxu0
    %v928 = vadd.f32 0.0, %v927
    %v929 = vpop.f32.mrf.mxu0
    %v930 = vadd.f32 0.0, %v929
    %v931 = vpop.f32.mrf.mxu0
    %v932 = vadd.f32 0.0, %v931
    %933 = vdwg.mxu0
    %934 = vmatprep.subr.bf16.mxu0 %v682
    %935 = vmatpush1.bf16.msra.mxu0 %v681
    %936 = vmatprep.subr.bf16.mxu0 %v680
    %937 = vmatpush1.bf16.msra.mxu0 %v679
    %938 = vmatprep.subr.bf16.mxu0 %v678
    %939 = vmatpush1.bf16.msra.mxu0 %v677
    %940 = vmatprep.subr.bf16.mxu0 %v676
    %941 = vmatpush1.bf16.msra.mxu0 %v675
    %942 = vmatprep.subr.bf16.mxu0 %v674
    %943 = vmatpush1.bf16.msra.mxu0 %v673
    %944 = vmatprep.subr.bf16.mxu0 %v672
    %945 = vmatpush1.bf16.msra.mxu0 %v671
    %946 = vmatprep.subr.bf16.mxu0 %v670
    %947 = vmatpush1.bf16.msra.mxu0 %v669
    %948 = vmatprep.subr.bf16.mxu0 %v668
    %949 = vmatpush1.bf16.msra.mxu0 %v667
    %950 = vmatprep.subr.bf16.mxu0 %v698
    %951 = vmatpush2.bf16.msra.mxu0 %v697
    %952 = vmatprep.subr.bf16.mxu0 %v696
    %953 = vmatpush2.bf16.msra.mxu0 %v695
    %954 = vmatprep.subr.bf16.mxu0 %v694
    %955 = vmatpush2.bf16.msra.mxu0 %v693
    %956 = vmatprep.subr.bf16.mxu0 %v692
    %957 = vmatpush2.bf16.msra.mxu0 %v691
    %958 = vmatprep.subr.bf16.mxu0 %v690
    %959 = vmatpush2.bf16.msra.mxu0 %v689
    %960 = vmatprep.subr.bf16.mxu0 %v688
    %961 = vmatpush2.bf16.msra.mxu0 %v687
    %962 = vmatprep.subr.bf16.mxu0 %v686
    %963 = vmatpush2.bf16.msra.mxu0 %v685
    %964 = vmatprep.subr.bf16.mxu0 %v684
    %965 = vmatpush2.bf16.msra.mxu0 %v683
    %966 = vmatprep.mubr.bf16.mxu0 %v238
    %967 = vmatmul.mubr.bf16.gmra.mxu0 %v237
    %v968 = vpop.f32.mrf.mxu0
    %v969 = vadd.f32 %v926, %v968
    %v970 = vpop.f32.mrf.mxu0
    %v971 = vadd.f32 %v928, %v970
    %v972 = vpop.f32.mrf.mxu0
    %v973 = vadd.f32 %v930, %v972
    %v974 = vpop.f32.mrf.mxu0
    %v975 = vadd.f32 %v932, %v974
    %976 = vdwg.mxu0
    %977 = vmatprep.subr.bf16.mxu0 %v714
    %978 = vmatpush1.bf16.msra.mxu0 %v713
    %979 = vmatprep.subr.bf16.mxu0 %v712
    %980 = vmatpush1.bf16.msra.mxu0 %v711
    %981 = vmatprep.subr.bf16.mxu0 %v710
    %982 = vmatpush1.bf16.msra.mxu0 %v709
    %983 = vmatprep.subr.bf16.mxu0 %v708
    %984 = vmatpush1.bf16.msra.mxu0 %v707
    %985 = vmatprep.subr.bf16.mxu0 %v706
    %986 = vmatpush1.bf16.msra.mxu0 %v705
    %987 = vmatprep.subr.bf16.mxu0 %v704
    %988 = vmatpush1.bf16.msra.mxu0 %v703
    %989 = vmatprep.subr.bf16.mxu0 %v702
    %990 = vmatpush1.bf16.msra.mxu0 %v701
    %991 = vmatprep.subr.bf16.mxu0 %v700
    %992 = vmatpush1.bf16.msra.mxu0 %v699
    %993 = vmatprep.subr.bf16.mxu0 %v730
    %994 = vmatpush2.bf16.msra.mxu0 %v729
    %995 = vmatprep.subr.bf16.mxu0 %v728
    %996 = vmatpush2.bf16.msra.mxu0 %v727
    %997 = vmatprep.subr.bf16.mxu0 %v726
    %998 = vmatpush2.bf16.msra.mxu0 %v725
    %999 = vmatprep.subr.bf16.mxu0 %v724
    %1000 = vmatpush2.bf16.msra.mxu0 %v723
    %1001 = vmatprep.subr.bf16.mxu0 %v722
    %1002 = vmatpush2.bf16.msra.mxu0 %v721
    %1003 = vmatprep.subr.bf16.mxu0 %v720
    %1004 = vmatpush2.bf16.msra.mxu0 %v719
    %1005 = vmatprep.subr.bf16.mxu0 %v718
    %1006 = vmatpush2.bf16.msra.mxu0 %v717
    %1007 = vmatprep.subr.bf16.mxu0 %v716
    %1008 = vmatpush2.bf16.msra.mxu0 %v715
    %1009 = vmatprep.mubr.bf16.mxu0 %v240
    %1010 = vmatmul.mubr.bf16.gmra.mxu0 %v239
    %v1011 = vpop.f32.mrf.mxu0
    %v1012 = vadd.f32 %v969, %v1011
    %v1013 = vpop.f32.mrf.mxu0
    %v1014 = vadd.f32 %v971, %v1013
    %v1015 = vpop.f32.mrf.mxu0
    %v1016 = vadd.f32 %v973, %v1015
    %v1017 = vpop.f32.mrf.mxu0
    %v1018 = vadd.f32 %v975, %v1017
    %1019 = vdwg.mxu0
    %1020 = vmatprep.subr.bf16.mxu0 %v746
    %1021 = vmatpush1.bf16.msra.mxu0 %v745
    %1022 = vmatprep.subr.bf16.mxu0 %v744
    %1023 = vmatpush1.bf16.msra.mxu0 %v743
    %1024 = vmatprep.subr.bf16.mxu0 %v742
    %1025 = vmatpush1.bf16.msra.mxu0 %v741
    %1026 = vmatprep.subr.bf16.mxu0 %v740
    %1027 = vmatpush1.bf16.msra.mxu0 %v739
    %1028 = vmatprep.subr.bf16.mxu0 %v738
    %1029 = vmatpush1.bf16.msra.mxu0 %v737
    %1030 = vmatprep.subr.bf16.mxu0 %v736
    %1031 = vmatpush1.bf16.msra.mxu0 %v735
    %1032 = vmatprep.subr.bf16.mxu0 %v734
    %1033 = vmatpush1.bf16.msra.mxu0 %v733
    %1034 = vmatprep.subr.bf16.mxu0 %v732
    %1035 = vmatpush1.bf16.msra.mxu0 %v731
    %1036 = vmatprep.subr.bf16.mxu0 %v762
    %1037 = vmatpush2.bf16.msra.mxu0 %v761
    %1038 = vmatprep.subr.bf16.mxu0 %v760
    %1039 = vmatpush2.bf16.msra.mxu0 %v759
    %1040 = vmatprep.subr.bf16.mxu0 %v758
    %1041 = vmatpush2.bf16.msra.mxu0 %v757
    %1042 = vmatprep.subr.bf16.mxu0 %v756
    %1043 = vmatpush2.bf16.msra.mxu0 %v755
    %1044 = vmatprep.subr.bf16.mxu0 %v754
    %1045 = vmatpush2.bf16.msra.mxu0 %v753
    %1046 = vmatprep.subr.bf16.mxu0 %v752
    %1047 = vmatpush2.bf16.msra.mxu0 %v751
    %1048 = vmatprep.subr.bf16.mxu0 %v750
    %1049 = vmatpush2.bf16.msra.mxu0 %v749
    %1050 = vmatprep.subr.bf16.mxu0 %v748
    %1051 = vmatpush2.bf16.msra.mxu0 %v747
    %1052 = vmatprep.mubr.bf16.mxu0 %v242
    %1053 = vmatmul.mubr.bf16.gmra.mxu0 %v241
    %v1054 = vpop.f32.mrf.mxu0
    %v1055 = vadd.f32 %v1012, %v1054
    %v1056 = vpop.f32.mrf.mxu0
    %v1057 = vadd.f32 %v1014, %v1056
    %v1058 = vpop.f32.mrf.mxu0
    %v1059 = vadd.f32 %v1016, %v1058
    %v1060 = vpop.f32.mrf.mxu0
    %v1061 = vadd.f32 %v1018, %v1060
    %1062 = vdwg.mxu0
    %v1063 = vadd.f32 %v71, %v1055
    %v1064 = vadd.f32 %v72, %v1057
    %v1065 = vadd.f32 %v73, %v1059
    %v1066 = vadd.f32 %v74, %v1061
    %1067 = vst [vmem:[#allocation2] sm:$0xff] %v1063
    %1068 = vst [vmem:[#allocation2 + $0x8] sm:$0xff] %v1064
    %1069 = vst [vmem:[#allocation2 + $0x10] sm:$0xff] %v1065
    %1070 = vst [vmem:[#allocation2 + $0x18] sm:$0xff] %v1066
    // Predicated region
    $region38: #{tpu_custom_call.1} parent=1 // pred_check
      %p1071 = pneg %p63
    $region39: #{tpu_custom_call.1} parent=1 // pred_check_branch
      %1073 = sbr.rel (%p1071) target = $region41
    $region40: #{tpu_custom_call.1} parent=1 // pred_region
      %v1074 = vld [vmem:[#allocation2] sm:$0xff]
      %v1075 = vld [vmem:[#allocation2 + $0x8] sm:$0xff]
      %v1076 = vld [vmem:[#allocation2 + $0x10] sm:$0xff]
      %v1077 = vld [vmem:[#allocation2 + $0x18] sm:$0xff]
      %v1078 = vld [vmem:[%s2] sm:$0x3]
      %v1080 = vlaneseq
      %v1081 = vshrl.u32 %v1080, 7
      %v1082 = vsub.s32 0, %v1081
      %v1083 = vrot.slane %v1078, %v1082
      %v1084 = vlaneseq
      %v1085 = vshrl.u32 %v1084, 7
      %v1086 = vsub.s32 1, %v1085
      %v1087 = vrot.slane %v1078, %v1086
      %v1090 = vadd.f32 %v1074, %v1083
      %v1091 = vadd.f32 %v1075, %v1087
      %v1092 = vadd.f32 %v1076, %v1083
      %v1093 = vadd.f32 %v1077, %v1087
      %v1094 = vmax.f32 %v1090, 0.0
      %v1095 = vmax.f32 %v1091, 0.0
      %v1096 = vmax.f32 %v1092, 0.0
      %v1097 = vmax.f32 %v1093, 0.0
      %v1098 = vpack.c.bf16 %v1096, %v1094
      %v1099 = vpack.c.bf16 %v1097, %v1095
      %v1100 = vld [vmem:[#allocation8] sm:$0xf]
      %v1101 = vld [vmem:[#allocation8 + $0x4] sm:$0xf]
      %v1102 = vld [vmem:[#allocation8 + $0x8] sm:$0xf]
      %v1103 = vld [vmem:[#allocation8 + $0xc] sm:$0xf]
      %v1104 = vld [vmem:[#allocation8 + $0x10] sm:$0xf]
      %v1105 = vld [vmem:[#allocation8 + $0x14] sm:$0xf]
      %v1106 = vld [vmem:[#allocation8 + $0x18] sm:$0xf]
      %v1107 = vld [vmem:[#allocation8 + $0x1c] sm:$0xf]
      %v1108 = vld [vmem:[#allocation8 + $0x20] sm:$0xf]
      %v1109 = vld [vmem:[#allocation8 + $0x24] sm:$0xf]
      %v1110 = vld [vmem:[#allocation8 + $0x28] sm:$0xf]
      %v1111 = vld [vmem:[#allocation8 + $0x2c] sm:$0xf]
      %v1112 = vld [vmem:[#allocation8 + $0x30] sm:$0xf]
      %v1113 = vld [vmem:[#allocation8 + $0x34] sm:$0xf]
      %v1114 = vld [vmem:[#allocation8 + $0x38] sm:$0xf]
      %v1115 = vld [vmem:[#allocation8 + $0x3c] sm:$0xf]
      %v1116 = vld [vmem:[#allocation8 + $0x40] sm:$0xf]
      %v1117 = vld [vmem:[#allocation8 + $0x44] sm:$0xf]
      %v1118 = vld [vmem:[#allocation8 + $0x48] sm:$0xf]
      %v1119 = vld [vmem:[#allocation8 + $0x4c] sm:$0xf]
      %v1120 = vld [vmem:[#allocation8 + $0x50] sm:$0xf]
      %v1121 = vld [vmem:[#allocation8 + $0x54] sm:$0xf]
      %v1122 = vld [vmem:[#allocation8 + $0x58] sm:$0xf]
      %v1123 = vld [vmem:[#allocation8 + $0x5c] sm:$0xf]
      %v1124 = vld [vmem:[#allocation8 + $0x60] sm:$0xf]
      %v1125 = vld [vmem:[#allocation8 + $0x64] sm:$0xf]
      %v1126 = vld [vmem:[#allocation8 + $0x68] sm:$0xf]
      %v1127 = vld [vmem:[#allocation8 + $0x6c] sm:$0xf]
      %v1128 = vld [vmem:[#allocation8 + $0x70] sm:$0xf]
      %v1129 = vld [vmem:[#allocation8 + $0x74] sm:$0xf]
      %v1130 = vld [vmem:[#allocation8 + $0x78] sm:$0xf]
      %v1131 = vld [vmem:[#allocation8 + $0x7c] sm:$0xf]
      %v1132 = vld [vmem:[%s4] sm:$0x1]
      %v1134 = vlaneseq
      %v1135 = vshrl.u32 %v1134, 7
      %v1136 = vsub.s32 0, %v1135
      %v1137 = vrot.slane %v1132, %v1136
      %v1171 = vunpack.c.l.b16 %v1100
      %v1172 = vunpack.c.l.b16 %v1101
      %v1173 = vunpack.c.l.b16 %v1102
      %v1174 = vunpack.c.l.b16 %v1103
      %v1175 = vunpack.c.l.b16 %v1104
      %v1176 = vunpack.c.l.b16 %v1105
      %v1177 = vunpack.c.l.b16 %v1106
      %v1178 = vunpack.c.l.b16 %v1107
      %v1179 = vunpack.c.l.b16 %v1108
      %v1180 = vunpack.c.l.b16 %v1109
      %v1181 = vunpack.c.l.b16 %v1110
      %v1182 = vunpack.c.l.b16 %v1111
      %v1183 = vunpack.c.l.b16 %v1112
      %v1184 = vunpack.c.l.b16 %v1113
      %v1185 = vunpack.c.l.b16 %v1114
      %v1186 = vunpack.c.l.b16 %v1115
      %v1187 = vunpack.c.l.b16 %v1116
      %v1188 = vunpack.c.l.b16 %v1117
      %v1189 = vunpack.c.l.b16 %v1118
      %v1190 = vunpack.c.l.b16 %v1119
      %v1191 = vunpack.c.l.b16 %v1120
      %v1192 = vunpack.c.l.b16 %v1121
      %v1193 = vunpack.c.l.b16 %v1122
      %v1194 = vunpack.c.l.b16 %v1123
      %v1195 = vunpack.c.l.b16 %v1124
      %v1196 = vunpack.c.l.b16 %v1125
      %v1197 = vunpack.c.l.b16 %v1126
      %v1198 = vunpack.c.l.b16 %v1127
      %v1199 = vunpack.c.l.b16 %v1128
      %v1200 = vunpack.c.l.b16 %v1129
      %v1201 = vunpack.c.l.b16 %v1130
      %v1202 = vunpack.c.l.b16 %v1131
      %v1203 = vpack.c.b16 %v1172, %v1171
      %v1204 = vpack.c.b16 %v1174, %v1173
      %v1205 = vpack.c.b16 %v1176, %v1175
      %v1206 = vpack.c.b16 %v1178, %v1177
      %v1207 = vpack.c.b16 %v1180, %v1179
      %v1208 = vpack.c.b16 %v1182, %v1181
      %v1209 = vpack.c.b16 %v1184, %v1183
      %v1210 = vpack.c.b16 %v1186, %v1185
      %v1211 = vpack.c.b16 %v1188, %v1187
      %v1212 = vpack.c.b16 %v1190, %v1189
      %v1213 = vpack.c.b16 %v1192, %v1191
      %v1214 = vpack.c.b16 %v1194, %v1193
      %v1215 = vpack.c.b16 %v1196, %v1195
      %v1216 = vpack.c.b16 %v1198, %v1197
      %v1217 = vpack.c.b16 %v1200, %v1199
      %v1218 = vpack.c.b16 %v1202, %v1201
      %1235 = vmatprep.subr.bf16.mxu0 0
      %1236 = vmatpush1.bf16.msra.mxu0 %v1210
      %1237 = vmatprep.subr.bf16.mxu0 0
      %1238 = vmatpush1.bf16.msra.mxu0 %v1209
      %1239 = vmatprep.subr.bf16.mxu0 0
      %1240 = vmatpush1.bf16.msra.mxu0 %v1208
      %1241 = vmatprep.subr.bf16.mxu0 0
      %1242 = vmatpush1.bf16.msra.mxu0 %v1207
      %1243 = vmatprep.subr.bf16.mxu0 0
      %1244 = vmatpush1.bf16.msra.mxu0 %v1206
      %1245 = vmatprep.subr.bf16.mxu0 0
      %1246 = vmatpush1.bf16.msra.mxu0 %v1205
      %1247 = vmatprep.subr.bf16.mxu0 0
      %1248 = vmatpush1.bf16.msra.mxu0 %v1204
      %1249 = vmatprep.subr.bf16.mxu0 0
      %1250 = vmatpush1.bf16.msra.mxu0 %v1203
      %1251 = vmatprep.subr.bf16.mxu0 0
      %1252 = vmatpush2.bf16.msra.mxu0 %v1218
      %1253 = vmatprep.subr.bf16.mxu0 0
      %1254 = vmatpush2.bf16.msra.mxu0 %v1217
      %1255 = vmatprep.subr.bf16.mxu0 0
      %1256 = vmatpush2.bf16.msra.mxu0 %v1216
      %1257 = vmatprep.subr.bf16.mxu0 0
      %1258 = vmatpush2.bf16.msra.mxu0 %v1215
      %1259 = vmatprep.subr.bf16.mxu0 0
      %1260 = vmatpush2.bf16.msra.mxu0 %v1214
      %1261 = vmatprep.subr.bf16.mxu0 0
      %1262 = vmatpush2.bf16.msra.mxu0 %v1213
      %1263 = vmatprep.subr.bf16.mxu0 0
      %1264 = vmatpush2.bf16.msra.mxu0 %v1212
      %1265 = vmatprep.subr.bf16.mxu0 0
      %1266 = vmatpush2.bf16.msra.mxu0 %v1211
      %1267 = vmatprep.mubr.bf16.mxu0 %v1099
      %1268 = vmatmul.mubr.bf16.gmra.mxu0 %v1098
      %v1269 = vpop.f32.mrf.mxu0
      %v1270 = vadd.f32 %v1137, %v1269
      %v1271 = vpop.f32.mrf.mxu0
      %v1272 = vpop.f32.mrf.mxu0
      %v1273 = vadd.f32 %v1137, %v1272
      %v1274 = vpop.f32.mrf.mxu0
      %1275 = vdwg.mxu0
      %v1276 = vmul.f32 %v1270, %v1270
      %v1277 = vmul.f32 %v1273, %v1273
      %1278 = vadd.xlane.f32.xlu0 %v1276
      %v1279 = vpop.xlane.xlu0 %1278
      %1280 = vadd.xlane.f32.xlu0 %v1277
      %v1281 = vpop.xlane.xlu0 %1280
      %v1282 = vadd.f32 %v1279, 1e-16
      %v1283 = vadd.f32 %v1281, 1e-16
      %v1284 = vrsqrt.pop %v1282
      %v1285 = vrsqrt.pop %v1283
      %v1286 = vmul.f32 %v1270, %v1284
      %v1287 = vmul.f32 %v1273, %v1285
      %v1288 = vmul.f32 %v1286, 2.0
      %v1289 = vmul.f32 %v1287, 2.0
      %v1290 = vpack.c.bf16 %v1289, %v1288
      %v1291 = vpack.c.bf16 %v1287, %v1286
      %1292 = vmatprep.subr.bf16.mxu0 0
      %1293 = vmatpush1.bf16.xpose.msra.mxu0 0
      %1294 = vmatprep.subr.bf16.mxu0 0
      %1295 = vmatpush1.bf16.xpose.msra.mxu0 0
      %1296 = vmatprep.subr.bf16.mxu0 0
      %1297 = vmatpush1.bf16.xpose.msra.mxu0 0
      %1298 = vmatprep.subr.bf16.mxu0 0
      %1299 = vmatpush1.bf16.xpose.msra.mxu0 0
      %1300 = vmatprep.subr.bf16.mxu0 0
      %1301 = vmatpush1.bf16.xpose.msra.mxu0 0
      %1302 = vmatprep.subr.bf16.mxu0 0
      %1303 = vmatpush1.bf16.xpose.msra.mxu0 0
      %1304 = vmatprep.subr.bf16.mxu0 0
      %1305 = vmatpush1.bf16.xpose.msra.mxu0 0
      %1306 = vmatprep.subr.bf16.mxu0 0
      %1307 = vmatpush1.bf16.xpose.msra.mxu0 %v1291
      %1308 = vmatprep.subr.bf16.mxu0 0
      %1309 = vmatpush2.bf16.xpose.msra.mxu0 0
      %1310 = vmatprep.subr.bf16.mxu0 0
      %1311 = vmatpush2.bf16.xpose.msra.mxu0 0
      %1312 = vmatprep.subr.bf16.mxu0 0
      %1313 = vmatpush2.bf16.xpose.msra.mxu0 0
      %1314 = vmatprep.subr.bf16.mxu0 0
      %1315 = vmatpush2.bf16.xpose.msra.mxu0 0
      %1316 = vmatprep.subr.bf16.mxu0 0
      %1317 = vmatpush2.bf16.xpose.msra.mxu0 0
      %1318 = vmatprep.subr.bf16.mxu0 0
      %1319 = vmatpush2.bf16.xpose.msra.mxu0 0
      %1320 = vmatprep.subr.bf16.mxu0 0
      %1321 = vmatpush2.bf16.xpose.msra.mxu0 0
      %1322 = vmatprep.subr.bf16.mxu0 0
      %1323 = vmatpush2.bf16.xpose.msra.mxu0 0
      %1324 = vmatprep.mubr.bf16.mxu0 0
      %1325 = vmatmul.mubr.bf16.gmra.mxu0 %v1290
      %v1326 = vpop.f32.mrf.mxu0
      %v1327 = vadd.f32 0.0, %v1326
      %v1328 = vpop.f32.mrf.mxu0
      %v1329 = vpop.f32.mrf.mxu0
      %v1330 = vadd.f32 0.0, %v1329
      %v1331 = vpop.f32.mrf.mxu0
      %1332 = vdwg.mxu0
      %v1333 = vmul.f32 %v1286, %v1287
      %1334 = vadd.xlane.f32.xlu0 %v1333
      %v1335 = vpop.xlane.xlu0 %1334
      %v1336 = vrot.slane %v1335, 4
      %v1337 = vadd.f32 %v1335, %v1336
      %v1338 = vrot.slane %v1337, 2
      %v1339 = vadd.f32 %v1337, %v1338
      %v1340 = vrot.slane %v1339, 1
      %v1341 = vadd.f32 %v1339, %v1340
      %s1342 = vtos %v1341
      %v1343 = vstv %s1342
      %v1344 = vlaneseq
      %v1345 = vshrl.u32 %v1344, 7
      %v1346 = vadd.s32 %v1345, 8
      %v1347 = vlaneseq
      %v1348 = vand.u32 %v1347, 127
      %vm1349 = vcmp.eq.s32.totalorder %v1345, %v1348
      %vm1350 = vcmp.eq.s32.totalorder %v1346, %v1348
      %v1351 = vsel %vm1349, -1e+30, %v1327
      %v1352 = vsel %vm1350, -1e+30, %v1330
      %vm1353 = vcmask 130048
      %v1354 = vsel %vm1353, %v1351, -inf
      %1355 = vmax.xlane.f32.xlu0 %v1354
      %v1356 = vpop.xlane.xlu0 %1355
      %v1357 = vsel %vm1353, %v1352, -inf
      %1358 = vmax.xlane.f32.xlu0 %v1357
      %v1359 = vpop.xlane.xlu0 %1358
      %v1360 = vsub.f32 %v1351, %v1356
      %v1361 = vsub.f32 %v1352, %v1359
      %v1362 = vmul.f32 %v1360, 1.442695
      %v1363 = vpow.pop %v1362
      %v1364 = vmul.f32 %v1361, 1.442695
      %v1365 = vpow.pop %v1364
      %v1366 = vsel %vm1353, %v1363, 0.0
      %1367 = vadd.xlane.f32.xlu0 %v1366
      %v1368 = vpop.xlane.xlu0 %1367
      %v1369 = vsel %vm1353, %v1365, 0.0
      %1370 = vadd.xlane.f32.xlu0 %v1369
      %v1371 = vpop.xlane.xlu0 %1370
      %v1372 = vlog2.pop %v1368
      %v1373 = vmul.f32 %v1372, 0.6931472
      %v1374 = vlog2.pop %v1371
      %v1375 = vmul.f32 %v1374, 0.6931472
      %v1376 = vadd.f32 %v1373, %v1356
      %v1377 = vadd.f32 %v1375, %v1359
      %vm1378 = vcmask 7168
      %v1379 = vsel %vm1378, %v1376, 0.0
      %v1380 = vsel %vm1378, %v1377, 0.0
      %v1381 = vadd.f32 %v1379, %v1380
      %1382 = vadd.xlane.f32.xlu0 %v1381
      %v1383 = vpop.xlane.xlu0 %1382
      %v1384 = vrot.slane %v1383, 4
      %v1385 = vadd.f32 %v1383, %v1384
      %v1386 = vrot.slane %v1385, 2
      %v1387 = vadd.f32 %v1385, %v1386
      %v1388 = vrot.slane %v1387, 1
      %v1389 = vadd.f32 %v1387, %v1388
      %s1390 = vtos %v1389
      %v1391 = vstv %s1390
      %v1392 = vmul.f32 %v1343, 4.0
      %v1393 = vsub.f32 %v1391, %v1392
      %v1394 = vmul.f32 %v1393, 0.0625
      %vm1395 = vcmask 0
      %1396 = vst.msk [vmem:[#allocation9] sm:$0x1] %vm1395, %v1394
    $region41: #{tpu_custom_call.1} parent=1 // pred_fallthru
      _
    // Predicated region
    $region42: #{tpu_custom_call.1} parent=1 // pred_check
      _
    $region43: #{tpu_custom_call.1} parent=1 // pred_check_branch
      %1398 = sbr.rel (0) target = $region45
    $region44: #{tpu_custom_call.1} parent=1 // pred_region
      %s1400 = ssub.s32 16, 16
      %1401 = vsyncadd [#allocation5], %s1400
      %s1403 = sshll.u32 [#allocation9], 4
      %s1404 = int_to_ptr.vmem [resolvable:$true] %s1403
      %1406 = dma.vmem_to_hbm [thread:$0]  %s1404, 16, %s5, [#allocation5]
    $region45: #{tpu_custom_call.1} parent=1 // pred_fallthru
      _
    // Predicated region
    $region46: #{tpu_custom_call.1} parent=1 // pred_check
      _
    $region47: #{tpu_custom_call.1} parent=1 // pred_check_branch
      %1408 = sbr.rel (0) target = $region49
    $region48: #{tpu_custom_call.1} parent=1 // pred_region
      %1409 = dma.done [#allocation5], 16
    $region49: #{tpu_custom_call.1} parent=1 // pred_fallthru
      _
    %1410 = vsyncpa [#allocation4], 1
    %1411 = vsyncpa [#allocation7], 1
    %1412 = vsyncpa [#allocation5], 1

</llo_original>
